<compile_context>
chip_gen: v5e
topology: v5e:2x2
jax: 0.10.0
libtpu: 0.0.40
codegen_flags: <defaults>
</compile_context>

<pallas_src>
import math

import jax
import jax.numpy as jnp
from jax.experimental import pallas as pl
from jax.experimental.pallas import tpu as pltpu

LANE = 128  # TPU lane width; pad output/lane-dense feature dims to this.


def _round_up(x, m):
    return (x + m - 1) // m * m


def _cdiv(a, b):
    return -(-a // b)


def _agent_mlp_kernel(x_ref, w1_ref, b1_ref, w2_ref, b2_ref, o_ref):
    """Fused MLP forward: o = relu(x @ W1 + b1) @ W2 + b2.

    x arrives in its natural (unpadded-K) f32 layout and is cast to bf16 here;
    W1/W2 are bf16 (MXU-native); accumulation and biases are f32; the output
    is stored in o_ref.dtype (bf16 by default) over lane-dense 128-wide tiles.
    """
    x = x_ref[...].astype(jnp.bfloat16)                          # (TB, K) bf16
    h = jnp.dot(x, w1_ref[...],
                preferred_element_type=jnp.float32) + b1_ref[...]
    h = jnp.maximum(h, 0.0)                                      # f32 ReLU
    out = jnp.dot(h.astype(jnp.bfloat16), w2_ref[...],
                  preferred_element_type=jnp.float32) + b2_ref[...]
    o_ref[...] = out.astype(o_ref.dtype)


class PallasMLPAgent:
    """Deterministic agent: Linear(in, hidden) -> ReLU -> Linear(hidden, out).

    hidden / out are zero-padded to lane-dense (multiples of 128) widths and
    the weights kept in bf16; the padded columns are exactly zero so the
    logical result is unchanged (modulo bf16 precision of weights/inputs).
    The contraction dim (in_features) is NOT padded.
    """

    def __init__(self, in_features, hidden, out_features, key,
                 batch_tile=512, out_dtype=jnp.bfloat16,
                 single_block_max_bytes=None):
        self.in_f = int(in_features)
        self.out_f = int(out_features)
        self.hp = _round_up(hidden, LANE)
        self.op = _round_up(out_features, LANE)
        self.batch_tile = int(batch_tile)
        self.out_dtype = out_dtype

        k1, k2, k3, k4 = jax.random.split(key, 4)
        w1 = jax.random.normal(k1, (in_features, hidden), jnp.float32)
        w1 = w1 / jnp.sqrt(jnp.float32(in_features))
        w2 = jax.random.normal(k2, (hidden, out_features), jnp.float32)
        w2 = w2 / jnp.sqrt(jnp.float32(hidden))
        b1 = 0.1 * jax.random.normal(k3, (1, hidden), jnp.float32)
        b2 = 0.1 * jax.random.normal(k4, (1, out_features), jnp.float32)

        # Pad only the lane-dense (output) dims; weights bf16, biases f32.
        self.w1 = jnp.pad(w1, ((0, 0), (0, self.hp - hidden))).astype(jnp.bfloat16)
        self.w2 = jnp.pad(w2, ((0, self.hp - hidden),
                               (0, self.op - out_features))).astype(jnp.bfloat16)
        self.b1 = jnp.pad(b1, ((0, 0), (0, self.hp - hidden)))
        self.b2 = jnp.pad(b2, ((0, 0), (0, self.op - out_features)))

        # Single-block cutoff derived from VMEM capacity (v7x has 64 MiB vs
        # 128 MiB on v5e/v6e); stay well inside the scoped default.
        if single_block_max_bytes is None:
            try:
                vmem_bytes = pltpu.get_tpu_info().vmem_capacity_bytes
            except Exception:
                vmem_bytes = 64 << 20
            single_block_max_bytes = vmem_bytes // 4
        out_bytes = jnp.dtype(out_dtype).itemsize
        bytes_per_row = self.in_f * 4 + self.hp * 4 + self.op * out_bytes
        self.single_block_max_rows = max(8, single_block_max_bytes // bytes_per_row)

    # --- gridless path: whole problem is one VMEM-resident block ------------
    def _single_block_call(self, x, batch):
        vmem = pl.BlockSpec(memory_space=pltpu.MemorySpace.VMEM)
        return pl.pallas_call(
            _agent_mlp_kernel,
            out_shape=jax.ShapeDtypeStruct((batch, self.op), self.out_dtype),
            in_specs=[vmem, vmem, vmem, vmem, vmem],
            out_specs=vmem,
        )(x, self.w1, self.b1, self.w2, self.b2)

    # --- tiled path: stream x/out over batch tiles, weights stay resident ---
    def _tiled_call(self, xp, bp, tb):
        in_f, hp, op = self.in_f, self.hp, self.op
        grid = (bp // tb,)
        return pl.pallas_call(
            _agent_mlp_kernel,
            out_shape=jax.ShapeDtypeStruct((bp, op), self.out_dtype),
            grid_spec=pltpu.PrefetchScalarGridSpec(
                num_scalar_prefetch=0,
                grid=grid,
                in_specs=[
                    pl.BlockSpec((tb, in_f), lambda i: (i, 0)),
                    pl.BlockSpec((in_f, hp), lambda i: (0, 0)),
                    pl.BlockSpec((1, hp), lambda i: (0, 0)),
                    pl.BlockSpec((hp, op), lambda i: (0, 0)),
                    pl.BlockSpec((1, op), lambda i: (0, 0)),
                ],
                out_specs=pl.BlockSpec((tb, op), lambda i: (i, 0)),
            ),
            compiler_params=pltpu.CompilerParams(
                dimension_semantics=("parallel",)),
        )(xp, self.w1, self.b1, self.w2, self.b2)

    def __call__(self, x):
        batch = x.shape[0]
        x = x.astype(jnp.float32)  # natural K width; bf16 cast is in-kernel
        if batch <= self.single_block_max_rows:
            out_p = self._single_block_call(x, batch)
        else:
            # Even number of grid steps (>= 2) so v7x's two TensorCores both
            # get work under dimension_semantics=("parallel",).
            n_steps = 2 * max(1, _cdiv(batch, 2 * self.batch_tile))
            tb = _round_up(_cdiv(batch, n_steps), 8)
            bp = tb * n_steps
            xp = x if bp == batch else jnp.pad(x, ((0, bp - batch), (0, 0)))
            out_p = self._tiled_call(xp, bp, tb)[:batch]
        # Trim lane padding; with bf16 output this copy is half the bytes.
        # Downstream code that can consume the 128-wide padded output should
        # use out_p directly instead.
        return out_p[:, :self.out_f]


class DeterministicWrapper:
    """
    Simple wrapper that makes a deterministic agent.
    No sampling is run on top of the wrapped agent; it is passed as-is.
    Exact semantic match of the PyTorch module: forward(*args, **kwargs)
    returns agent(*args, **kwargs) unchanged.
    """

    def __init__(self, agent):
        self.agent = agent

    def __call__(self, *args, **kwargs):
        out = self.agent(*args, **kwargs)
        return out


def _mlp_reference(agent, x):
    """Pure-JAX reference of the same bf16-weight MLP (for correctness)."""
    xb = x.astype(jnp.bfloat16)
    h = jnp.dot(xb, agent.w1, preferred_element_type=jnp.float32) + agent.b1
    h = jnp.maximum(h, 0.0)
    o = jnp.dot(h.astype(jnp.bfloat16), agent.w2,
                preferred_element_type=jnp.float32) + agent.b2
    return o[:, :agent.out_f]


if __name__ == "__main__":
    key = jax.random.PRNGKey(0)
    k_params, k_x, k_x2 = jax.random.split(key, 3)

    batch, in_features, hidden, out_features = 8, 32, 64, 16
    agent = PallasMLPAgent(in_features, hidden, out_features, k_params)
    wrapper = DeterministicWrapper(agent)

    # Small batch -> gridless single-block kernel.
    x = jax.random.normal(k_x, (batch, in_features), jnp.float32)
    out = jax.block_until_ready(wrapper(x))
    assert out.shape == (batch, out_features)

    # DeterministicWrapper is a pure pass-through of the agent.
    ref_agent = jax.block_until_ready(agent(x))
    assert bool(jnp.all(out == ref_agent))

    # Numerical check vs the pure-JAX reference (bf16 weights/inputs,
    # f32 accumulate, bf16 output).
    ref = jax.block_until_ready(_mlp_reference(agent, x))
    assert bool(jnp.allclose(out.astype(jnp.float32), ref, rtol=3e-2, atol=3e-2))

    # Force the batch-tiled path (tiny single-block budget, small tile) to
    # exercise resident weights + even grid + batch padding, still at small
    # shapes.  batch=144 -> 4 steps of tb=40 (bp=160), padded rows sliced off.
    agent_t = PallasMLPAgent(in_features, hidden, out_features, k_params,
                             batch_tile=64, single_block_max_bytes=4096)
    x_big = jax.random.normal(k_x2, (144, in_features), jnp.float32)
    out_big = jax.block_until_ready(DeterministicWrapper(agent_t)(x_big))
    ref_big = jax.block_until_ready(_mlp_reference(agent_t, x_big))
    assert out_big.shape == (144, out_features)
    assert bool(jnp.allclose(out_big.astype(jnp.float32), ref_big,
                             rtol=3e-2, atol=3e-2))

    print("KERNEL_OK")
</pallas_src>

<mosaic_0001>
module attributes {stable_mosaic.version = 11 : i64} {
  func.func @_agent_mlp_kernel(%arg0: memref<8x32xf32, #tpu.memory_space<vmem>>, %arg1: memref<32x128xbf16, #tpu.memory_space<vmem>>, %arg2: memref<1x128xf32, #tpu.memory_space<vmem>>, %arg3: memref<128x128xbf16, #tpu.memory_space<vmem>>, %arg4: memref<1x128xf32, #tpu.memory_space<vmem>>, %arg5: memref<8x128xbf16, #tpu.memory_space<vmem>>) attributes {dimension_semantics = [], scalar_prefetch = 0 : i64, scratch_operands = 0 : i64, tpu.core_type = #tpu.core_type<tc>} {
    %c0 = arith.constant 0 : index
    %c0_0 = arith.constant 0 : index
    %0 = vector.load %arg0[%c0, %c0_0] : memref<8x32xf32, #tpu.memory_space<vmem>>, vector<8x32xf32>
    %1 = arith.truncf %0 : vector<8x32xf32> to vector<8x32xbf16>
    %c0_1 = arith.constant 0 : index
    %c0_2 = arith.constant 0 : index
    %2 = vector.load %arg1[%c0_1, %c0_2] : memref<32x128xbf16, #tpu.memory_space<vmem>>, vector<32x128xbf16>
    %cst = arith.constant dense<0.000000e+00> : vector<8x128xf32>
    %3 = tpu.matmul %1, %2, %cst {dimension_numbers = #tpu.dot_dimension_numbers<[1], [0], [0], [1], [0, 0, 1, 1], [], []>} : vector<8x32xbf16>, vector<32x128xbf16>, vector<8x128xf32> -> vector<8x128xf32>
    %c0_3 = arith.constant 0 : index
    %c0_4 = arith.constant 0 : index
    %4 = vector.load %arg2[%c0_3, %c0_4] : memref<1x128xf32, #tpu.memory_space<vmem>>, vector<1x128xf32>
    %5 = vector.broadcast %4 : vector<1x128xf32> to vector<8x128xf32>
    %6 = arith.addf %3, %5 : vector<8x128xf32>
    %cst_5 = arith.constant 0.000000e+00 : f32
    %7 = vector.broadcast %cst_5 : f32 to vector<8x128xf32>
    %8 = arith.maximumf %6, %7 : vector<8x128xf32>
    %9 = arith.truncf %8 : vector<8x128xf32> to vector<8x128xbf16>
    %c0_6 = arith.constant 0 : index
    %c0_7 = arith.constant 0 : index
    %10 = vector.load %arg3[%c0_6, %c0_7] : memref<128x128xbf16, #tpu.memory_space<vmem>>, vector<128x128xbf16>
    %cst_8 = arith.constant dense<0.000000e+00> : vector<8x128xf32>
    %11 = tpu.matmul %9, %10, %cst_8 {dimension_numbers = #tpu.dot_dimension_numbers<[1], [0], [0], [1], [0, 0, 1, 1], [], []>} : vector<8x128xbf16>, vector<128x128xbf16>, vector<8x128xf32> -> vector<8x128xf32>
    %c0_9 = arith.constant 0 : index
    %c0_10 = arith.constant 0 : index
    %12 = vector.load %arg4[%c0_9, %c0_10] : memref<1x128xf32, #tpu.memory_space<vmem>>, vector<1x128xf32>
    %13 = vector.broadcast %12 : vector<1x128xf32> to vector<8x128xf32>
    %14 = arith.addf %11, %13 : vector<8x128xf32>
    %15 = arith.truncf %14 : vector<8x128xf32> to vector<8x128xbf16>
    %c0_11 = arith.constant 0 : index
    %c0_12 = arith.constant 0 : index
    %16 = vector.load %arg5[%c0_11, %c0_12] : memref<8x128xbf16, #tpu.memory_space<vmem>>, vector<8x128xbf16>
    tpu.vector_store %arg5[%c0_11, %c0_12], %15 {strides = array<i32>} : memref<8x128xbf16, #tpu.memory_space<vmem>>, vector<8x128xbf16>,
    return
  }
}

</mosaic_0001>

<llo_original>
// kernel: tpu_custom_call.1
$region0: #{tpu_custom_call.1}
  #allocation0 [shape = 'u32[]', space=smem, size = 0x4, offset = 0x4, fixed_abs, tag = 'smem constant byte address 0x4 - core index']
  #allocation1 [shape = 'u32[72,128]{1,0:T(1,128)}', space=vmem, size = 0x9000, scoped, tag = 'internal scratch']
  %s0 = inlined_call_operand.hbm [shape: f32[8,32], index: 0, kind: input, shape index: {}]
  %s1 = inlined_call_operand.hbm [shape: bf16[32,128], index: 1, kind: input, shape index: {}]
  %s2 = inlined_call_operand.vmem [shape: f32[1,128], index: 2, kind: input, shape index: {}]
  %s3 = inlined_call_operand.hbm [shape: bf16[128,128], index: 3, kind: input, shape index: {}]
  %s4 = inlined_call_operand.vmem [shape: f32[1,128], index: 4, kind: input, shape index: {}]
  %s5 = inlined_call_operand.hbm [shape: bf16[8,128], index: 5, kind: output, shape index: {}]
  %s6 = sld [smem:[#allocation0]]
  $region42: #{tpu_custom_call.1} parent=0
    _
  %s8 = ssub.s32 1, %s6
  %s9 = scalar_select 0, %s8, %s6
  $region1: #{tpu_custom_call.1} parent=0
    #allocation2 [shape = 'u8[4096]{0}', space=vmem, size = 0x1000, scoped, tag = 'input window, operand 0, single buffered']
    #allocation3 [shape = 's32[1]{0}', space=sflag, size = 0x4, scoped, tag = 'scoped memory for tpu_custom_call.1']
    #allocation4 [shape = 's32[1]{0}', space=sflag, size = 0x4, scoped, tag = 'scoped memory for tpu_custom_call.1']
    #allocation5 [shape = 'u8[8192]{0}', space=vmem, size = 0x2000, scoped, tag = 'input window, operand 1, single buffered']
    #allocation6 [shape = 's32[1]{0}', space=sflag, size = 0x4, scoped, tag = 'scoped memory for tpu_custom_call.1']
    #allocation7 [shape = 'u8[32768]{0}', space=vmem, size = 0x8000, scoped, tag = 'input window, operand 3, single buffered']
    #allocation8 [shape = 'u8[2048]{0}', space=vmem, size = 0x800, scoped, tag = 'output window, operand 0, single buffered']
    %10 = vsyncpa [#allocation3], 0
    %11 = vsyncpa [#allocation6], 0
    %12 = vsyncpa [#allocation4], 0
    // Predicated region
    $region2: #{tpu_custom_call.1} parent=1 // pred_check
      _
    $region3: #{tpu_custom_call.1} parent=1 // pred_check_branch
      %14 = sbr.rel (0) target = $region5
    $region4: #{tpu_custom_call.1} parent=1 // pred_region
      %16 = vsyncadd [#allocation3], 0
      %s18 = sshll.u32 %s0, 4
      %s19 = int_to_ptr.hbm [resolvable:$true] %s18
      %s20 = sshll.u32 [#allocation2], 4
      %s21 = int_to_ptr.vmem [resolvable:$true] %s20
      %23 = dma.hbm_to_vmem [thread:$0]  %s19, 128, %s21, [#allocation3]
    $region5: #{tpu_custom_call.1} parent=1 // pred_fallthru
      _
    // Predicated region
    $region6: #{tpu_custom_call.1} parent=1 // pred_check
      _
    $region7: #{tpu_custom_call.1} parent=1 // pred_check_branch
      %25 = sbr.rel (0) target = $region9
    $region8: #{tpu_custom_call.1} parent=1 // pred_region
      %27 = vsyncadd [#allocation6], 0
      %s28 = sshll.u32 %s1, 4
      %s29 = int_to_ptr.hbm [resolvable:$true] %s28
      %s30 = sshll.u32 [#allocation5], 4
      %s31 = int_to_ptr.vmem [resolvable:$true] %s30
      %36 = dma.hbm_to_vmem [thread:$0]  %s29, 256, %s31, [#allocation6], 64, 64, 4
    $region9: #{tpu_custom_call.1} parent=1 // pred_fallthru
      _
    // Predicated region
    $region10: #{tpu_custom_call.1} parent=1 // pred_check
      _
    $region11: #{tpu_custom_call.1} parent=1 // pred_check_branch
      %38 = sbr.rel (0) target = $region13
    $region12: #{tpu_custom_call.1} parent=1 // pred_region
      _
    $region13: #{tpu_custom_call.1} parent=1 // pred_fallthru
      _
    // Predicated region
    $region14: #{tpu_custom_call.1} parent=1 // pred_check
      _
    $region15: #{tpu_custom_call.1} parent=1 // pred_check_branch
      %40 = sbr.rel (0) target = $region17
    $region16: #{tpu_custom_call.1} parent=1 // pred_region
      %42 = vsyncadd [#allocation6], 0
      %s43 = sshll.u32 %s3, 4
      %s44 = int_to_ptr.hbm [resolvable:$true] %s43
      %s45 = sshll.u32 [#allocation7], 4
      %s46 = int_to_ptr.vmem [resolvable:$true] %s45
      %51 = dma.hbm_to_vmem [thread:$0]  %s44, 1024, %s46, [#allocation6], 64, 64, 4
    $region17: #{tpu_custom_call.1} parent=1 // pred_fallthru
      _
    // Predicated region
    $region18: #{tpu_custom_call.1} parent=1 // pred_check
      _
    $region19: #{tpu_custom_call.1} parent=1 // pred_check_branch
      %53 = sbr.rel (0) target = $region21
    $region20: #{tpu_custom_call.1} parent=1 // pred_region
      _
    $region21: #{tpu_custom_call.1} parent=1 // pred_fallthru
      _
    // Predicated region
    $region22: #{tpu_custom_call.1} parent=1 // pred_check
      _
    $region23: #{tpu_custom_call.1} parent=1 // pred_check_branch
      %55 = sbr.rel (0) target = $region25
    $region24: #{tpu_custom_call.1} parent=1 // pred_region
      %57 = dma.done [#allocation3], 128
    $region25: #{tpu_custom_call.1} parent=1 // pred_fallthru
      _
    // Predicated region
    $region26: #{tpu_custom_call.1} parent=1 // pred_check
      _
    $region27: #{tpu_custom_call.1} parent=1 // pred_check_branch
      %59 = sbr.rel (0) target = $region29
    $region28: #{tpu_custom_call.1} parent=1 // pred_region
      %61 = dma.done [#allocation6], 256
    $region29: #{tpu_custom_call.1} parent=1 // pred_fallthru
      _
    // Predicated region
    $region30: #{tpu_custom_call.1} parent=1 // pred_check
      _
    $region31: #{tpu_custom_call.1} parent=1 // pred_check_branch
      %63 = sbr.rel (0) target = $region33
    $region32: #{tpu_custom_call.1} parent=1 // pred_region
      %65 = dma.done [#allocation6], 1024
    $region33: #{tpu_custom_call.1} parent=1 // pred_fallthru
      _
    %v67 = vld [vmem:[#allocation2] sm:$0xff]
    %v68 = vpack.c.bf16 %v67, %v67
    %v69 = vld [vmem:[#allocation5] sm:$0xf]
    %v70 = vld [vmem:[#allocation5 + $0x4] sm:$0xf]
    %v71 = vld [vmem:[#allocation5 + $0x8] sm:$0xf]
    %v72 = vld [vmem:[#allocation5 + $0xc] sm:$0xf]
    %v73 = vld [vmem:[%s2] sm:$0x1]
    %v75 = vperm.slane %v73, 0
    %v81 = vunpack.c.l.b16 %v69
    %v82 = vunpack.c.l.b16 %v70
    %v83 = vunpack.c.l.b16 %v71
    %v84 = vunpack.c.l.b16 %v72
    %v85 = vpack.c.b16 %v82, %v81
    %v86 = vpack.c.b16 %v84, %v83
    %vm89 = vcmask 261120
    %v91 = vsel %vm89, %v68, 0
    %93 = vmatpush.bf16.msra.mxu0 0
    %94 = vmatpush.bf16.msra.mxu0 0
    %95 = vmatpush.bf16.msra.mxu0 0
    %96 = vmatpush.bf16.msra.mxu0 0
    %97 = vmatpush.bf16.msra.mxu0 0
    %98 = vmatpush.bf16.msra.mxu0 0
    %99 = vmatpush.bf16.msra.mxu0 %v86
    %100 = vmatpush.bf16.msra.mxu0 %v85
    %101 = vmatmul.bf16.gmra.mxu0 %v91
    %v102 = vpop.f32.mrf.mxu0
    %v103 = vadd.f32 %v75, %v102
    %v104 = vpop.f32.mrf.mxu0
    %105 = vdwg.mxu0
    %v106 = vmax.f32 %v103, 0.0
    %v107 = vpack.c.bf16 %v106, %v106
    %v108 = vld [vmem:[#allocation7] sm:$0xf]
    %v109 = vld [vmem:[#allocation7 + $0x4] sm:$0xf]
    %v110 = vld [vmem:[#allocation7 + $0x8] sm:$0xf]
    %v111 = vld [vmem:[#allocation7 + $0xc] sm:$0xf]
    %v112 = vld [vmem:[#allocation7 + $0x10] sm:$0xf]
    %v113 = vld [vmem:[#allocation7 + $0x14] sm:$0xf]
    %v114 = vld [vmem:[#allocation7 + $0x18] sm:$0xf]
    %v115 = vld [vmem:[#allocation7 + $0x1c] sm:$0xf]
    %v116 = vld [vmem:[#allocation7 + $0x20] sm:$0xf]
    %v117 = vld [vmem:[#allocation7 + $0x24] sm:$0xf]
    %v118 = vld [vmem:[#allocation7 + $0x28] sm:$0xf]
    %v119 = vld [vmem:[#allocation7 + $0x2c] sm:$0xf]
    %v120 = vld [vmem:[#allocation7 + $0x30] sm:$0xf]
    %v121 = vld [vmem:[#allocation7 + $0x34] sm:$0xf]
    %v122 = vld [vmem:[#allocation7 + $0x38] sm:$0xf]
    %v123 = vld [vmem:[#allocation7 + $0x3c] sm:$0xf]
    %v124 = vld [vmem:[%s4] sm:$0x1]
    %v126 = vperm.slane %v124, 0
    %v144 = vunpack.c.l.b16 %v108
    %v145 = vunpack.c.l.b16 %v109
    %v146 = vunpack.c.l.b16 %v110
    %v147 = vunpack.c.l.b16 %v111
    %v148 = vunpack.c.l.b16 %v112
    %v149 = vunpack.c.l.b16 %v113
    %v150 = vunpack.c.l.b16 %v114
    %v151 = vunpack.c.l.b16 %v115
    %v152 = vunpack.c.l.b16 %v116
    %v153 = vunpack.c.l.b16 %v117
    %v154 = vunpack.c.l.b16 %v118
    %v155 = vunpack.c.l.b16 %v119
    %v156 = vunpack.c.l.b16 %v120
    %v157 = vunpack.c.l.b16 %v121
    %v158 = vunpack.c.l.b16 %v122
    %v159 = vunpack.c.l.b16 %v123
    %v160 = vpack.c.b16 %v145, %v144
    %v161 = vpack.c.b16 %v147, %v146
    %v162 = vpack.c.b16 %v149, %v148
    %v163 = vpack.c.b16 %v151, %v150
    %v164 = vpack.c.b16 %v153, %v152
    %v165 = vpack.c.b16 %v155, %v154
    %v166 = vpack.c.b16 %v157, %v156
    %v167 = vpack.c.b16 %v159, %v158
    %176 = vmatpush.bf16.msra.mxu0 %v167
    %177 = vmatpush.bf16.msra.mxu0 %v166
    %178 = vmatpush.bf16.msra.mxu0 %v165
    %179 = vmatpush.bf16.msra.mxu0 %v164
    %180 = vmatpush.bf16.msra.mxu0 %v163
    %181 = vmatpush.bf16.msra.mxu0 %v162
    %182 = vmatpush.bf16.msra.mxu0 %v161
    %183 = vmatpush.bf16.msra.mxu0 %v160
    %184 = vmatmul.bf16.gmra.mxu0 %v107
    %v185 = vpop.f32.mrf.mxu0
    %v186 = vadd.f32 %v126, %v185
    %v187 = vpop.f32.mrf.mxu0
    %188 = vdwg.mxu0
    %v189 = vpack.c.bf16 %v186, %v186
    %190 = vst [vmem:[#allocation8] sm:$0xf] %v189
    // Predicated region
    $region34: #{tpu_custom_call.1} parent=1 // pred_check
      _
    $region35: #{tpu_custom_call.1} parent=1 // pred_check_branch
      %192 = sbr.rel (0) target = $region37
    $region36: #{tpu_custom_call.1} parent=1 // pred_region
      %194 = vsyncadd [#allocation4], 0
      %s196 = sshll.u32 [#allocation8], 4
      %s197 = int_to_ptr.vmem [resolvable:$true] %s196
      %s198 = sshll.u32 %s5, 4
      %s199 = int_to_ptr.hbm [resolvable:$true] %s198
      %201 = dma.vmem_to_hbm [thread:$0]  %s197, 64, %s199, [#allocation4]
    $region37: #{tpu_custom_call.1} parent=1 // pred_fallthru
      _
    // Predicated region
    $region38: #{tpu_custom_call.1} parent=1 // pred_check
      _
    $region39: #{tpu_custom_call.1} parent=1 // pred_check_branch
      %203 = sbr.rel (0) target = $region41
    $region40: #{tpu_custom_call.1} parent=1 // pred_region
      %205 = dma.done [#allocation4], 64
    $region41: #{tpu_custom_call.1} parent=1 // pred_fallthru
      _
    %206 = vsyncpa [#allocation3], 1
    %207 = vsyncpa [#allocation6], 1
    %208 = vsyncpa [#allocation4], 1

</llo_original>
